<compile_context>
chip_gen: v7x
topology: tpu7x:2x2x1
jax: 0.10.0
libtpu: 0.0.40
codegen_flags: <defaults>
</compile_context>

<pallas_src>
import jax
import jax.numpy as jnp
from jax.experimental import pallas as pl
from jax.experimental.pallas import tpu as pltpu


def mlp_kernel(x_ref, w1_ref, b1_ref, w2_ref, b2_ref, w3_ref, b3_ref, o_ref):
    # x_ref: (1, TB)    batch on lanes
    # w1: (10, 1)  b1: (10, 1)
    # w2: (10, 10) b2: (10, 1)
    # w3: (1, 10)  b3: (1, 1)
    x = x_ref[...]                                        # (1, TB)

    # fc1 + tanh: K = 1 -> VPU broadcast multiply-add + EUP tanh.
    h1 = jnp.tanh(w1_ref[...] * x + b1_ref[...])          # (10, TB)

    # fc2 + tanh: (10,10) @ (10,TB) on the MXU, f32 accumulation.
    h2 = jnp.dot(w2_ref[...], h1, preferred_element_type=jnp.float32) + b2_ref[...]
    h2 = jnp.tanh(h2)                                     # (10, TB)

    # fc3: (1,10) @ (10,TB) -> dense (1,TB) row, unmasked lane-dense store.
    y = jnp.dot(w3_ref[...], h2, preferred_element_type=jnp.float32) + b3_ref[...]
    o_ref[...] = y.astype(o_ref.dtype)                    # (1, TB)


def _round_up(n, m):
    return ((n + m - 1) // m) * m


def neural_network_forward(x, params):
    """x: (B, 1) f32; params: dict with w1,b1,w2,b2,w3,b3 in PyTorch (out,in) shapes."""
    w1 = params["w1"].astype(jnp.float32)
    w2 = params["w2"].astype(jnp.float32)
    w3 = params["w3"].astype(jnp.float32)
    b1c = params["b1"].astype(jnp.float32).reshape(-1, 1)  # (10, 1)
    b2c = params["b2"].astype(jnp.float32).reshape(-1, 1)  # (10, 1)
    b3c = params["b3"].astype(jnp.float32).reshape(-1, 1)  # (1, 1)
    B = x.shape[0]

    # Batch on lanes.
    x_t = x.astype(jnp.float32).reshape(B, 1).T            # (1, B)

    # Lane tile over the batch axis (multiple of 128); weights stay VMEM-resident.
    TB = min(2048, _round_up(B, 128))
    B_pad = _round_up(B, TB)
    if B_pad != B:
        x_t = jnp.pad(x_t, ((0, 0), (0, B_pad - B)))

    grid = (B_pad // TB,)
    const2d = lambda a: pl.BlockSpec(a.shape, lambda i: (0, 0))  # VMEM-resident params

    y_t = pl.pallas_call(
        mlp_kernel,
        out_shape=jax.ShapeDtypeStruct((1, B_pad), jnp.float32),
        grid=grid,
        in_specs=[
            pl.BlockSpec((1, TB), lambda i: (0, i)),        # x tile (lane-dense)
            const2d(w1), const2d(b1c),
            const2d(w2), const2d(b2c),
            const2d(w3), const2d(b3c),
        ],
        out_specs=pl.BlockSpec((1, TB), lambda i: (0, i)),
        compiler_params=pltpu.CompilerParams(
            dimension_semantics=("parallel",)),             # shard batch across TCs (v7x)
    )(x_t, w1, b1c, w2, b2c, w3, b3c)

    return y_t[:, :B].T                                     # back to (B, 1)


def init_params(key):
    """Deterministic init matching nn.Linear shapes (uniform like PyTorch default)."""
    ks = jax.random.split(key, 6)

    def linear_init(kw, kb, out_f, in_f):
        bound = 1.0 / jnp.sqrt(in_f)
        w = jax.random.uniform(kw, (out_f, in_f), jnp.float32, -bound, bound)
        b = jax.random.uniform(kb, (out_f,), jnp.float32, -bound, bound)
        return w, b

    w1, b1 = linear_init(ks[0], ks[1], 10, 1)
    w2, b2 = linear_init(ks[2], ks[3], 10, 10)
    w3, b3 = linear_init(ks[4], ks[5], 1, 10)
    return {"w1": w1, "b1": b1, "w2": w2, "b2": b2, "w3": w3, "b3": b3}


def reference_forward(x, p):
    h1 = jnp.tanh(x @ p["w1"].T + p["b1"])
    h2 = jnp.tanh(h1 @ p["w2"].T + p["b2"])
    return h2 @ p["w3"].T + p["b3"]


if __name__ == "__main__":
    key = jax.random.PRNGKey(0)
    kx, kp = jax.random.split(key)

    B = 8
    x = jax.random.normal(kx, (B, 1), dtype=jnp.float32)
    params = init_params(kp)

    out = jax.block_until_ready(neural_network_forward(x, params))
    ref = reference_forward(x, params)
    assert out.shape == (B, 1), out.shape
    assert jnp.allclose(out, ref, atol=1e-5, rtol=1e-5), (out, ref)

    # Also exercise a batch that is not a lane multiple (padding path).
    B2 = 300
    x2 = jax.random.normal(kx, (B2, 1), dtype=jnp.float32)
    out2 = jax.block_until_ready(neural_network_forward(x2, params))
    ref2 = reference_forward(x2, params)
    assert out2.shape == (B2, 1), out2.shape
    assert jnp.allclose(out2, ref2, atol=1e-5, rtol=1e-5)

    print("KERNEL_OK")
</pallas_src>

<mosaic_0001>
module attributes {stable_mosaic.version = 11 : i64} {
  func.func @mlp_kernel(%arg0: i32, %arg1: memref<1x128xf32, #tpu.memory_space<vmem>>, %arg2: memref<10x1xf32, #tpu.memory_space<vmem>>, %arg3: memref<10x1xf32, #tpu.memory_space<vmem>>, %arg4: memref<10x10xf32, #tpu.memory_space<vmem>>, %arg5: memref<10x1xf32, #tpu.memory_space<vmem>>, %arg6: memref<1x10xf32, #tpu.memory_space<vmem>>, %arg7: memref<1x1xf32, #tpu.memory_space<vmem>>, %arg8: memref<1x128xf32, #tpu.memory_space<vmem>>) attributes {dimension_semantics = [#tpu.dimension_semantics<parallel>], iteration_bounds = array<i64: 1>, scalar_prefetch = 0 : i64, scratch_operands = 0 : i64, tpu.core_type = #tpu.core_type<tc>, window_params = [{transform_indices = @transform_0, window_bounds = array<i64: 1, 128>}, {pipeline_mode = #tpu.pipeline_mode<synchronous>, transform_indices = @transform_1, window_bounds = array<i64: 10, 1>}, {pipeline_mode = #tpu.pipeline_mode<synchronous>, transform_indices = @transform_2, window_bounds = array<i64: 10, 1>}, {pipeline_mode = #tpu.pipeline_mode<synchronous>, transform_indices = @transform_3, window_bounds = array<i64: 10, 10>}, {pipeline_mode = #tpu.pipeline_mode<synchronous>, transform_indices = @transform_4, window_bounds = array<i64: 10, 1>}, {pipeline_mode = #tpu.pipeline_mode<synchronous>, transform_indices = @transform_5, window_bounds = array<i64: 1, 10>}, {pipeline_mode = #tpu.pipeline_mode<synchronous>, transform_indices = @transform_6, window_bounds = array<i64: 1, 1>}, {transform_indices = @transform_7, window_bounds = array<i64: 1, 128>}]} {
    %c0 = arith.constant 0 : index
    %c0_0 = arith.constant 0 : index
    %0 = vector.load %arg1[%c0, %c0_0] : memref<1x128xf32, #tpu.memory_space<vmem>>, vector<1x128xf32>
    %c0_1 = arith.constant 0 : index
    %c0_2 = arith.constant 0 : index
    %1 = vector.load %arg2[%c0_1, %c0_2] : memref<10x1xf32, #tpu.memory_space<vmem>>, vector<10x1xf32>
    %2 = vector.broadcast %1 : vector<10x1xf32> to vector<10x128xf32>
    %3 = vector.broadcast %0 : vector<1x128xf32> to vector<10x128xf32>
    %4 = arith.mulf %2, %3 : vector<10x128xf32>
    %c0_3 = arith.constant 0 : index
    %c0_4 = arith.constant 0 : index
    %5 = vector.load %arg3[%c0_3, %c0_4] : memref<10x1xf32, #tpu.memory_space<vmem>>, vector<10x1xf32>
    %6 = vector.broadcast %5 : vector<10x1xf32> to vector<10x128xf32>
    %7 = arith.addf %4, %6 : vector<10x128xf32>
    %8 = math.tanh %7 : vector<10x128xf32>
    %c0_5 = arith.constant 0 : index
    %c0_6 = arith.constant 0 : index
    %9 = vector.load %arg4[%c0_5, %c0_6] : memref<10x10xf32, #tpu.memory_space<vmem>>, vector<10x10xf32>
    %cst = arith.constant dense<0.000000e+00> : vector<10x128xf32>
    %10 = tpu.matmul %9, %8, %cst {dimension_numbers = #tpu.dot_dimension_numbers<[1], [0], [0], [1], [0, 0, 1, 1], [], []>} : vector<10x10xf32>, vector<10x128xf32>, vector<10x128xf32> -> vector<10x128xf32>
    %c0_7 = arith.constant 0 : index
    %c0_8 = arith.constant 0 : index
    %11 = vector.load %arg5[%c0_7, %c0_8] : memref<10x1xf32, #tpu.memory_space<vmem>>, vector<10x1xf32>
    %12 = vector.broadcast %11 : vector<10x1xf32> to vector<10x128xf32>
    %13 = arith.addf %10, %12 : vector<10x128xf32>
    %14 = math.tanh %13 : vector<10x128xf32>
    %c0_9 = arith.constant 0 : index
    %c0_10 = arith.constant 0 : index
    %15 = vector.load %arg6[%c0_9, %c0_10] : memref<1x10xf32, #tpu.memory_space<vmem>>, vector<1x10xf32>
    %cst_11 = arith.constant dense<0.000000e+00> : vector<1x128xf32>
    %16 = tpu.matmul %15, %14, %cst_11 {dimension_numbers = #tpu.dot_dimension_numbers<[1], [0], [0], [1], [0, 0, 1, 1], [], []>} : vector<1x10xf32>, vector<10x128xf32>, vector<1x128xf32> -> vector<1x128xf32>
    %c0_12 = arith.constant 0 : index
    %c0_13 = arith.constant 0 : index
    %17 = vector.load %arg7[%c0_12, %c0_13] : memref<1x1xf32, #tpu.memory_space<vmem>>, vector<1x1xf32>
    %18 = vector.broadcast %17 : vector<1x1xf32> to vector<1x128xf32>
    %19 = arith.addf %16, %18 : vector<1x128xf32>
    %c0_14 = arith.constant 0 : index
    %c0_15 = arith.constant 0 : index
    %20 = vector.load %arg8[%c0_14, %c0_15] : memref<1x128xf32, #tpu.memory_space<vmem>>, vector<1x128xf32>
    tpu.vector_store %arg8[%c0_14, %c0_15], %19 {strides = array<i32>} : memref<1x128xf32, #tpu.memory_space<vmem>>, vector<1x128xf32>,
    return
  }
  func.func @transform_0(%arg0: i32) -> (i32, i32) {
    %c0_i32 = arith.constant 0 : i32
    %c0_i32_0 = arith.constant 0 : i32
    return %c0_i32, %arg0 : i32, i32
  }
  func.func @transform_1(%arg0: i32) -> (i32, i32) {
    %c0_i32 = arith.constant 0 : i32
    %c0_i32_0 = arith.constant 0 : i32
    %c0_i32_1 = arith.constant 0 : i32
    return %c0_i32, %c0_i32_0 : i32, i32
  }
  func.func @transform_2(%arg0: i32) -> (i32, i32) {
    %c0_i32 = arith.constant 0 : i32
    %c0_i32_0 = arith.constant 0 : i32
    %c0_i32_1 = arith.constant 0 : i32
    return %c0_i32, %c0_i32_0 : i32, i32
  }
  func.func @transform_3(%arg0: i32) -> (i32, i32) {
    %c0_i32 = arith.constant 0 : i32
    %c0_i32_0 = arith.constant 0 : i32
    %c0_i32_1 = arith.constant 0 : i32
    return %c0_i32, %c0_i32_0 : i32, i32
  }
  func.func @transform_4(%arg0: i32) -> (i32, i32) {
    %c0_i32 = arith.constant 0 : i32
    %c0_i32_0 = arith.constant 0 : i32
    %c0_i32_1 = arith.constant 0 : i32
    return %c0_i32, %c0_i32_0 : i32, i32
  }
  func.func @transform_5(%arg0: i32) -> (i32, i32) {
    %c0_i32 = arith.constant 0 : i32
    %c0_i32_0 = arith.constant 0 : i32
    %c0_i32_1 = arith.constant 0 : i32
    return %c0_i32, %c0_i32_0 : i32, i32
  }
  func.func @transform_6(%arg0: i32) -> (i32, i32) {
    %c0_i32 = arith.constant 0 : i32
    %c0_i32_0 = arith.constant 0 : i32
    %c0_i32_1 = arith.constant 0 : i32
    return %c0_i32, %c0_i32_0 : i32, i32
  }
  func.func @transform_7(%arg0: i32) -> (i32, i32) {
    %c0_i32 = arith.constant 0 : i32
    %c0_i32_0 = arith.constant 0 : i32
    return %c0_i32, %arg0 : i32, i32
  }
}

</mosaic_0001>

<llo_original>
// kernel: tpu_custom_call.1
$region0: #{tpu_custom_call.1}
  #allocation0 [shape = 'u32[]', space=smem, size = 0x4, offset = 0x4, fixed_abs, tag = 'smem constant byte address 0x4 - core index']
  #allocation1 [shape = 'u32[144,128]{1,0:T(1,128)}', space=vmem, size = 0x12000, scoped, tag = 'internal scratch']
  #allocation2 [shape = 'f32[1,1]{1,0:T(1,128)S(1)}', space=vmem, size = 0x200, scoped, tag = 'scoped memory for tpu_custom_call.1']
  %s0 = inlined_call_operand.vmem [shape: f32[1,128], index: 0, kind: input, shape index: {}]
  %s1 = inlined_call_operand.vmem [shape: f32[10,1], index: 1, kind: input, shape index: {}]
  %s2 = inlined_call_operand.vmem [shape: f32[10,1], index: 2, kind: input, shape index: {}]
  %s3 = inlined_call_operand.vmem [shape: f32[10,10], index: 3, kind: input, shape index: {}]
  %s4 = inlined_call_operand.vmem [shape: f32[10,1], index: 4, kind: input, shape index: {}]
  %s5 = inlined_call_operand.vmem [shape: f32[1,10], index: 5, kind: input, shape index: {}]
  %s6 = inlined_call_operand.<no memory space> [shape: f32[1,1], index: 6, kind: input, shape index: {}]
  %s7 = inlined_call_operand.hbm [shape: f32[1,128], index: 7, kind: output, shape index: {}]
  %s8 = sld [smem:[#allocation0]]
  $region38: #{tpu_custom_call.1} parent=0
    _
  %s10 = ssub.s32 1, %s8
  %s11 = scalar_select 0, %s10, %s8
  %v12 = vstv %s6
  %13 = vst [vmem:[#allocation2] sm:$0x1] %v12
  $region1: #{tpu_custom_call.1} parent=0
    #allocation3 [shape = 'u8[512]{0}', space=vmem, size = 0x400, scoped, tag = 'output window, operand 0, single buffered']
    #allocation4 [shape = 's32[1]{0}', space=sflag, size = 0x4, scoped, tag = 'scoped memory for tpu_custom_call.1']
    %14 = vsyncpa [#allocation4], 0
    // Predicated region
    $region2: #{tpu_custom_call.1} parent=1 // pred_check
      _
    $region3: #{tpu_custom_call.1} parent=1 // pred_check_branch
      %16 = sbr.rel (0) target = $region5
    $region4: #{tpu_custom_call.1} parent=1 // pred_region
      _
    $region5: #{tpu_custom_call.1} parent=1 // pred_fallthru
      _
    // Predicated region
    $region6: #{tpu_custom_call.1} parent=1 // pred_check
      _
    $region7: #{tpu_custom_call.1} parent=1 // pred_check_branch
      %18 = sbr.rel (0) target = $region9
    $region8: #{tpu_custom_call.1} parent=1 // pred_region
      _
    $region9: #{tpu_custom_call.1} parent=1 // pred_fallthru
      _
    // Predicated region
    $region10: #{tpu_custom_call.1} parent=1 // pred_check
      _
    $region11: #{tpu_custom_call.1} parent=1 // pred_check_branch
      %20 = sbr.rel (0) target = $region13
    $region12: #{tpu_custom_call.1} parent=1 // pred_region
      _
    $region13: #{tpu_custom_call.1} parent=1 // pred_fallthru
      _
    // Predicated region
    $region14: #{tpu_custom_call.1} parent=1 // pred_check
      _
    $region15: #{tpu_custom_call.1} parent=1 // pred_check_branch
      %22 = sbr.rel (0) target = $region17
    $region16: #{tpu_custom_call.1} parent=1 // pred_region
      _
    $region17: #{tpu_custom_call.1} parent=1 // pred_fallthru
      _
    // Predicated region
    $region18: #{tpu_custom_call.1} parent=1 // pred_check
      _
    $region19: #{tpu_custom_call.1} parent=1 // pred_check_branch
      %24 = sbr.rel (0) target = $region21
    $region20: #{tpu_custom_call.1} parent=1 // pred_region
      _
    $region21: #{tpu_custom_call.1} parent=1 // pred_fallthru
      _
    // Predicated region
    $region22: #{tpu_custom_call.1} parent=1 // pred_check
      _
    $region23: #{tpu_custom_call.1} parent=1 // pred_check_branch
      %26 = sbr.rel (0) target = $region25
    $region24: #{tpu_custom_call.1} parent=1 // pred_region
      _
    $region25: #{tpu_custom_call.1} parent=1 // pred_fallthru
      _
    // Predicated region
    $region26: #{tpu_custom_call.1} parent=1 // pred_check
      _
    $region27: #{tpu_custom_call.1} parent=1 // pred_check_branch
      %28 = sbr.rel (0) target = $region29
    $region28: #{tpu_custom_call.1} parent=1 // pred_region
      _
    $region29: #{tpu_custom_call.1} parent=1 // pred_fallthru
      _
    %v29 = vld [vmem:[%s0] sm:$0x1]
    %v30 = vld [vmem:[%s1] sm:$0xff]
    %v31 = vld [vmem:[%s1 + $0x8] sm:$0x3]
    %33 = vset.pattern.permute.xlu0 0
    %34 = vperm.xlu0 %33, %v30
    %v35 = vpop.permute.xlu0 %34
    %38 = vset.pattern.permute.xlu0 0
    %39 = vperm.xlu0 %38, %v31
    %v40 = vpop.permute.xlu0 %39
    %v43 = vlaneseq
    %v44 = vshrl.u32 %v43, 7
    %v45 = vsub.s32 0, %v44
    %v46 = vrot.slane %v29, %v45
    %v48 = vmul.f32 %v35, %v46
    %v49 = vmul.f32 %v40, %v46
    %v50 = vld [vmem:[%s2] sm:$0xff]
    %v51 = vld [vmem:[%s2 + $0x8] sm:$0x3]
    %53 = vset.pattern.permute.xlu0 0
    %54 = vperm.xlu0 %53, %v50
    %v55 = vpop.permute.xlu0 %54
    %58 = vset.pattern.permute.xlu0 0
    %59 = vperm.xlu0 %58, %v51
    %v60 = vpop.permute.xlu0 %59
    %v62 = vadd.f32 %v48, %v55
    %v63 = vadd.f32 %v49, %v60
    %v64 = vtanh.pop %v62
    %v65 = vtanh.pop %v63
    %v66 = vld [vmem:[%s3] sm:$0xff]
    %v67 = vld [vmem:[%s3 + $0x8] sm:$0x3]
    %v68 = vld [vmem:[%s4] sm:$0xff]
    %v69 = vld [vmem:[%s4 + $0x8] sm:$0x3]
    %71 = vset.pattern.permute.xlu0 0
    %72 = vperm.xlu0 %71, %v68
    %v73 = vpop.permute.xlu0 %72
    %76 = vset.pattern.permute.xlu0 0
    %77 = vperm.xlu0 %76, %v69
    %v78 = vpop.permute.xlu0 %77
    %vm80 = vcmask 80896
    %v82 = vsel %vm80, %v66, 0
    %v85 = vsel %vm80, %v67, 0
    %vm87 = vcmask 1041408
    %v89 = vsel %vm87, %v65, 0
    %91 = vmatprep.subr.mxu0 0.0
    %92 = vmatpush1.msra.mxu0 %v64
    %93 = vmatprep.subr.mxu0 0.0
    %94 = vmatpush1.msra.mxu0 %v89
    %95 = vmatprep.subr.mxu0 0.0
    %96 = vmatpush1.msra.mxu0 0.0
    %97 = vmatprep.subr.mxu0 0.0
    %98 = vmatpush1.msra.mxu0 0.0
    %99 = vmatprep.subr.mxu0 0.0
    %100 = vmatpush1.msra.mxu0 0.0
    %101 = vmatprep.subr.mxu0 0.0
    %102 = vmatpush1.msra.mxu0 0.0
    %103 = vmatprep.subr.mxu0 0.0
    %104 = vmatpush1.msra.mxu0 0.0
    %105 = vmatprep.subr.mxu0 0.0
    %106 = vmatpush1.msra.mxu0 0.0
    %107 = vmatprep.subr.mxu0 0.0
    %108 = vmatpush1.msra.mxu0 0.0
    %109 = vmatprep.subr.mxu0 0.0
    %110 = vmatpush1.msra.mxu0 0.0
    %111 = vmatprep.subr.mxu0 0.0
    %112 = vmatpush1.msra.mxu0 0.0
    %113 = vmatprep.subr.mxu0 0.0
    %114 = vmatpush1.msra.mxu0 0.0
    %115 = vmatprep.subr.mxu0 0.0
    %116 = vmatpush1.msra.mxu0 0.0
    %117 = vmatprep.subr.mxu0 0.0
    %118 = vmatpush1.msra.mxu0 0.0
    %119 = vmatprep.subr.mxu0 0.0
    %120 = vmatpush1.msra.mxu0 0.0
    %121 = vmatprep.subr.mxu0 0.0
    %122 = vmatpush1.msra.mxu0 0.0
    %123 = vmatprep.subr.mxu0 0.0
    %124 = vmatpush1.msra.mxu0 0.0
    %125 = vmatprep.subr.mxu0 0.0
    %126 = vmatpush1.msra.mxu0 0.0
    %127 = vmatprep.subr.mxu0 0.0
    %128 = vmatpush1.msra.mxu0 0.0
    %129 = vmatprep.subr.mxu0 0.0
    %130 = vmatpush1.msra.mxu0 0.0
    %131 = vmatprep.subr.mxu0 0.0
    %132 = vmatpush1.msra.mxu0 0.0
    %133 = vmatprep.subr.mxu0 0.0
    %134 = vmatpush1.msra.mxu0 0.0
    %135 = vmatprep.subr.mxu0 0.0
    %136 = vmatpush1.msra.mxu0 0.0
    %137 = vmatprep.subr.mxu0 0.0
    %138 = vmatpush1.msra.mxu0 0.0
    %139 = vmatprep.subr.mxu0 0.0
    %140 = vmatpush1.msra.mxu0 0.0
    %141 = vmatprep.subr.mxu0 0.0
    %142 = vmatpush1.msra.mxu0 0.0
    %143 = vmatprep.subr.mxu0 0.0
    %144 = vmatpush1.msra.mxu0 0.0
    %145 = vmatprep.subr.mxu0 0.0
    %146 = vmatpush1.msra.mxu0 0.0
    %147 = vmatprep.subr.mxu0 0.0
    %148 = vmatpush1.msra.mxu0 0.0
    %149 = vmatprep.subr.mxu0 0.0
    %150 = vmatpush1.msra.mxu0 0.0
    %151 = vmatprep.subr.mxu0 0.0
    %152 = vmatpush1.msra.mxu0 0.0
    %153 = vmatprep.subr.mxu0 0.0
    %154 = vmatpush1.msra.mxu0 0.0
    %155 = vmatprep.mubr.f32.mxu0 0.0
    %156 = vmatmul.mubr.f32.gmra.mrb[0].mxu0 %v82
    %v157 = vpop.f32.mrb[0].mxu0
    %v158 = vadd.f32 %v73, %v157
    %v159 = vpop.f32.mrb[0].mxu0
    %160 = vmatprep.mubr.f32.mxu0 0.0
    %161 = vmatmul.mubr.f32.gmra.mrb[0].mxu0 %v85
    %v162 = vpop.f32.mrb[0].mxu0
    %v163 = vadd.f32 %v78, %v162
    %v164 = vpop.f32.mrb[0].mxu0
    %165 = vdwg.mxu0
    %v166 = vtanh.pop %v158
    %v167 = vtanh.pop %v163
    %v168 = vld [vmem:[%s5] sm:$0x1]
    %v169 = vld [vmem:[#allocation2] sm:$0x1]
    %171 = vset.pattern.permute.xlu0 0
    %172 = vperm.xlu0 %171, %v169
    %v173 = vpop.permute.xlu0 %172
    %v175 = vlaneseq
    %v176 = vshrl.u32 %v175, 7
    %v177 = vsub.s32 0, %v176
    %v178 = vrot.slane %v173, %v177
    %v180 = vsel %vm80, %v168, 0
    %v183 = vsel %vm87, %v167, 0
    %185 = vmatprep.subr.mxu0 0.0
    %186 = vmatpush1.msra.mxu0 %v166
    %187 = vmatprep.subr.mxu0 0.0
    %188 = vmatpush1.msra.mxu0 %v183
    %189 = vmatprep.subr.mxu0 0.0
    %190 = vmatpush1.msra.mxu0 0.0
    %191 = vmatprep.subr.mxu0 0.0
    %192 = vmatpush1.msra.mxu0 0.0
    %193 = vmatprep.subr.mxu0 0.0
    %194 = vmatpush1.msra.mxu0 0.0
    %195 = vmatprep.subr.mxu0 0.0
    %196 = vmatpush1.msra.mxu0 0.0
    %197 = vmatprep.subr.mxu0 0.0
    %198 = vmatpush1.msra.mxu0 0.0
    %199 = vmatprep.subr.mxu0 0.0
    %200 = vmatpush1.msra.mxu0 0.0
    %201 = vmatprep.subr.mxu0 0.0
    %202 = vmatpush1.msra.mxu0 0.0
    %203 = vmatprep.subr.mxu0 0.0
    %204 = vmatpush1.msra.mxu0 0.0
    %205 = vmatprep.subr.mxu0 0.0
    %206 = vmatpush1.msra.mxu0 0.0
    %207 = vmatprep.subr.mxu0 0.0
    %208 = vmatpush1.msra.mxu0 0.0
    %209 = vmatprep.subr.mxu0 0.0
    %210 = vmatpush1.msra.mxu0 0.0
    %211 = vmatprep.subr.mxu0 0.0
    %212 = vmatpush1.msra.mxu0 0.0
    %213 = vmatprep.subr.mxu0 0.0
    %214 = vmatpush1.msra.mxu0 0.0
    %215 = vmatprep.subr.mxu0 0.0
    %216 = vmatpush1.msra.mxu0 0.0
    %217 = vmatprep.subr.mxu0 0.0
    %218 = vmatpush1.msra.mxu0 0.0
    %219 = vmatprep.subr.mxu0 0.0
    %220 = vmatpush1.msra.mxu0 0.0
    %221 = vmatprep.subr.mxu0 0.0
    %222 = vmatpush1.msra.mxu0 0.0
    %223 = vmatprep.subr.mxu0 0.0
    %224 = vmatpush1.msra.mxu0 0.0
    %225 = vmatprep.subr.mxu0 0.0
    %226 = vmatpush1.msra.mxu0 0.0
    %227 = vmatprep.subr.mxu0 0.0
    %228 = vmatpush1.msra.mxu0 0.0
    %229 = vmatprep.subr.mxu0 0.0
    %230 = vmatpush1.msra.mxu0 0.0
    %231 = vmatprep.subr.mxu0 0.0
    %232 = vmatpush1.msra.mxu0 0.0
    %233 = vmatprep.subr.mxu0 0.0
    %234 = vmatpush1.msra.mxu0 0.0
    %235 = vmatprep.subr.mxu0 0.0
    %236 = vmatpush1.msra.mxu0 0.0
    %237 = vmatprep.subr.mxu0 0.0
    %238 = vmatpush1.msra.mxu0 0.0
    %239 = vmatprep.subr.mxu0 0.0
    %240 = vmatpush1.msra.mxu0 0.0
    %241 = vmatprep.subr.mxu0 0.0
    %242 = vmatpush1.msra.mxu0 0.0
    %243 = vmatprep.subr.mxu0 0.0
    %244 = vmatpush1.msra.mxu0 0.0
    %245 = vmatprep.subr.mxu0 0.0
    %246 = vmatpush1.msra.mxu0 0.0
    %247 = vmatprep.subr.mxu0 0.0
    %248 = vmatpush1.msra.mxu0 0.0
    %249 = vmatprep.mubr.f32.mxu0 0.0
    %250 = vmatmul.mubr.f32.gmra.mrb[0].mxu0 %v180
    %v251 = vpop.f32.mrb[0].mxu0
    %v252 = vadd.f32 %v178, %v251
    %v253 = vpop.f32.mrb[0].mxu0
    %254 = vdwg.mxu0
    %255 = vst [vmem:[#allocation3] sm:$0x1] %v252
    // Predicated region
    $region30: #{tpu_custom_call.1} parent=1 // pred_check
      _
    $region31: #{tpu_custom_call.1} parent=1 // pred_check_branch
      %257 = sbr.rel (0) target = $region33
    $region32: #{tpu_custom_call.1} parent=1 // pred_region
      %s259 = ssub.s32 16, 16
      %260 = vsyncadd [#allocation4], %s259
      %s262 = sshll.u32 [#allocation3], 4
      %s263 = int_to_ptr.vmem [resolvable:$true] %s262
      %265 = dma.vmem_to_hbm [thread:$0]  %s263, 16, %s7, [#allocation4]
    $region33: #{tpu_custom_call.1} parent=1 // pred_fallthru
      _
    // Predicated region
    $region34: #{tpu_custom_call.1} parent=1 // pred_check
      _
    $region35: #{tpu_custom_call.1} parent=1 // pred_check_branch
      %267 = sbr.rel (0) target = $region37
    $region36: #{tpu_custom_call.1} parent=1 // pred_region
      %268 = dma.done [#allocation4], 16
    $region37: #{tpu_custom_call.1} parent=1 // pred_fallthru
      _
    %269 = vsyncpa [#allocation4], 1

</llo_original>
